<compile_context>
chip_gen: v7x
topology: tpu7x:2x2x1
jax: 0.10.0
libtpu: 0.0.40
codegen_flags: <defaults>
</compile_context>

<pallas_src>
import jax
import jax.numpy as jnp
from jax.experimental import pallas as pl
from jax.experimental.pallas import tpu as pltpu

_MAX_OUTSTANDING_DMAS = 4            # 2-4 outstanding copies hide DMA latency
_MIN_CHUNK_BYTES = 2 * 1024 * 1024   # don't split below ~2 MiB per chunk
_SMALL_COPY_BYTES = 1 * 1024 * 1024  # below this a Pallas launch isn't worth it


def _make_hbm_copy_kernel(row_splits):
    """Kernel: chunked HBM->HBM DMA copy. `row_splits` are static row bounds."""
    n_chunks = len(row_splits) - 1

    def kernel(src_ref, dst_ref, sem):
        # Issue all chunk DMAs first (up to _MAX_OUTSTANDING_DMAS in flight),
        # then wait on all of them.  Static Python loop -> fully unrolled.
        copies = []
        for i in range(n_chunks):
            lo, hi = row_splits[i], row_splits[i + 1]
            cp = pltpu.make_async_copy(
                src_ref.at[lo:hi], dst_ref.at[lo:hi], sem.at[i])
            cp.start()
            copies.append(cp)
        for cp in copies:
            cp.wait()

    return kernel


def _chunk_row_splits(rows, total_bytes):
    """Balanced split of `rows` into <=4 chunks of >= _MIN_CHUNK_BYTES each."""
    n = max(1, min(_MAX_OUTSTANDING_DMAS, rows, total_bytes // _MIN_CHUNK_BYTES))
    base, rem = divmod(rows, n)
    splits = [0]
    for i in range(n):
        splits.append(splits[-1] + base + (1 if i < rem else 0))
    return splits


def _pallas_hbm_copy(x):
    """Identity copy of `x` into a fresh buffer via direct HBM->HBM DMA."""
    shape = x.shape
    itemsize = jnp.dtype(x.dtype).itemsize
    total_bytes = int(x.size) * itemsize

    # 2D view so chunk slicing is a simple leading-axis range.  No lane /
    # sublane constraints apply because the data never transits VMEM.
    if x.ndim == 0:
        flat = x.reshape(1, 1)
    else:
        flat = x.reshape(shape[0], -1)
    rows = flat.shape[0]

    row_splits = _chunk_row_splits(rows, total_bytes)
    n_chunks = len(row_splits) - 1

    out = pl.pallas_call(
        _make_hbm_copy_kernel(row_splits),
        out_shape=jax.ShapeDtypeStruct(flat.shape, flat.dtype),
        in_specs=[pl.BlockSpec(memory_space=pl.ANY)],
        out_specs=pl.BlockSpec(memory_space=pl.ANY),
        scratch_shapes=[pltpu.SemaphoreType.DMA((n_chunks,))],
        cost_estimate=pl.CostEstimate(
            flops=0, transcendentals=0, bytes_accessed=2 * total_bytes),
    )(flat)
    return out.reshape(shape)


def dummy_decoder_forward(tgt,
                          memory,
                          tgt_mask=None,
                          memory_mask=None,
                          tgt_key_padding_mask=None,
                          memory_key_padding_mask=None,
                          *,
                          materialize=True,
                          min_pallas_bytes=_SMALL_COPY_BYTES,
                          **_):
    """Pallas equivalent of DummyDecoder.forward: returns `memory`.

    materialize=False -> true identity (no kernel, no HBM traffic) — this is
                         exactly what the PyTorch module does.
    materialize=True  -> copy `memory` into a fresh buffer.  Payloads below
                         `min_pallas_bytes` use a plain XLA copy; larger ones
                         use the chunked HBM->HBM DMA Pallas kernel.
    """
    del tgt, tgt_mask, memory_mask, tgt_key_padding_mask, memory_key_padding_mask
    if not materialize:
        return memory  # fastest path: the module is a pure identity

    total_bytes = int(memory.size) * jnp.dtype(memory.dtype).itemsize
    if total_bytes == 0 or total_bytes < min_pallas_bytes:
        # Small-input bypass: fixed pallas_call launch overhead would dominate.
        return jnp.copy(memory)

    return _pallas_hbm_copy(memory)


if __name__ == "__main__":
    key = jax.random.PRNGKey(0)
    k_tgt, k_mem, k_big = jax.random.split(key, 3)

    S, B, D = 8, 2, 32  # (seq, batch, d_model)
    tgt = jax.random.normal(k_tgt, (S, B, D), dtype=jnp.float32)
    memory = jax.random.normal(k_mem, (S, B, D), dtype=jnp.float32)
    tgt_mask = jnp.zeros((S, S), dtype=jnp.float32)
    memory_mask = jnp.zeros((S, S), dtype=jnp.float32)
    tgt_key_padding_mask = jnp.zeros((B, S), dtype=jnp.bool_)
    memory_key_padding_mask = jnp.zeros((B, S), dtype=jnp.bool_)

    # 1) True zero-cost identity path (what DummyDecoder really does).
    ident = dummy_decoder_forward(
        tgt, memory, tgt_mask, memory_mask,
        tgt_key_padding_mask, memory_key_padding_mask, materialize=False)
    assert ident is memory

    # 2) Forced Pallas HBM->HBM DMA copy on the small input (single chunk).
    out = dummy_decoder_forward(
        tgt, memory, tgt_mask, memory_mask,
        tgt_key_padding_mask, memory_key_padding_mask,
        materialize=True, min_pallas_bytes=0)
    out = jax.block_until_ready(out)
    assert out.shape == memory.shape and out.dtype == memory.dtype
    assert bool(jnp.array_equal(out, memory))

    # 3) Multi-chunk path (4 outstanding DMAs) on a modest 8 MiB payload.
    big = jax.random.normal(k_big, (1024, 4, 512), dtype=jnp.float32)
    out_big = jax.block_until_ready(_pallas_hbm_copy(big))
    assert out_big.shape == big.shape and out_big.dtype == big.dtype
    assert bool(jnp.array_equal(out_big, big))

    print("KERNEL_OK")
</pallas_src>

<mosaic_0001>
module attributes {stable_mosaic.version = 11 : i64} {
  func.func @kernel(%arg0: memref<8x64xf32, #tpu.memory_space<any>>, %arg1: memref<8x64xf32, #tpu.memory_space<any>>, %arg2: memref<1x!tpu.dma_semaphore, #tpu.memory_space<semaphore_mem>>) attributes {dimension_semantics = [], scalar_prefetch = 0 : i64, scratch_operands = 1 : i64, tpu.core_type = #tpu.core_type<tc>} {
    %c0_i32 = arith.constant 0 : i32
    %c0_i32_0 = arith.constant 0 : i32
    %c0_i32_1 = arith.constant 0 : i32
    %0 = tpu.memref_slice %arg0[%c0_i32_0, %c0_i32_1] : memref<8x64xf32, #tpu.memory_space<any>> -> memref<8x64xf32, #tpu.memory_space<any>>
    %c0_i32_2 = arith.constant 0 : i32
    %c0_i32_3 = arith.constant 0 : i32
    %1 = tpu.memref_slice %arg1[%c0_i32_2, %c0_i32_3] : memref<8x64xf32, #tpu.memory_space<any>> -> memref<8x64xf32, #tpu.memory_space<any>>
    %2 = tpu.memref_slice %arg2[%c0_i32] : memref<1x!tpu.dma_semaphore, #tpu.memory_space<semaphore_mem>> -> memref<1x!tpu.dma_semaphore, #tpu.memory_space<semaphore_mem>>
    %3 = tpu.memref_squeeze %2 : memref<1x!tpu.dma_semaphore, #tpu.memory_space<semaphore_mem>> -> memref<!tpu.dma_semaphore, #tpu.memory_space<semaphore_mem>>
    tpu.enqueue_dma source(%0 : memref<8x64xf32, #tpu.memory_space<any>>) target(%1 : memref<8x64xf32, #tpu.memory_space<any>>) target_semaphore(%3 : memref<!tpu.dma_semaphore, #tpu.memory_space<semaphore_mem>>)
    %c0_i32_4 = arith.constant 0 : i32
    %c0_i32_5 = arith.constant 0 : i32
    %c0_i32_6 = arith.constant 0 : i32
    %4 = tpu.memref_slice %arg0[%c0_i32_5, %c0_i32_6] : memref<8x64xf32, #tpu.memory_space<any>> -> memref<8x64xf32, #tpu.memory_space<any>>
    %c0_i32_7 = arith.constant 0 : i32
    %c0_i32_8 = arith.constant 0 : i32
    %5 = tpu.memref_slice %arg1[%c0_i32_7, %c0_i32_8] : memref<8x64xf32, #tpu.memory_space<any>> -> memref<8x64xf32, #tpu.memory_space<any>>
    %6 = tpu.memref_slice %arg2[%c0_i32_4] : memref<1x!tpu.dma_semaphore, #tpu.memory_space<semaphore_mem>> -> memref<1x!tpu.dma_semaphore, #tpu.memory_space<semaphore_mem>>
    %7 = tpu.memref_squeeze %6 : memref<1x!tpu.dma_semaphore, #tpu.memory_space<semaphore_mem>> -> memref<!tpu.dma_semaphore, #tpu.memory_space<semaphore_mem>>
    tpu.wait_dma2 semaphore(%7 : memref<!tpu.dma_semaphore, #tpu.memory_space<semaphore_mem>>) src(%4 : memref<8x64xf32, #tpu.memory_space<any>>) dst(%5 : memref<8x64xf32, #tpu.memory_space<any>>)
    return
  }
}

</mosaic_0001>

<llo_original>
// kernel: tpu_custom_call.1
$region0: #{tpu_custom_call.1}
  #allocation0 [shape = 'u32[]', space=smem, size = 0x4, offset = 0x4, fixed_abs, tag = 'smem constant byte address 0x4 - core index']
  #allocation1 [shape = 'u32[144,128]{1,0:T(1,128)}', space=vmem, size = 0x12000, scoped, tag = 'internal scratch']
  #allocation2 [shape = 's32[1]{0}', space=sflag, size = 0x4, scoped, tag = 'scratch operand']
  #allocation3 [shape = 's32[]', space=sflag, size = 0x4, offset = 0, fixed_abs, tag = 'sflag constant byte address 0x0 - dummy sync flag']
  #allocation4 [shape = 'u32[0]{0}', space=smem, size = 0, offset = 0, fixed_abs, tag = 'smem constant byte address 0x0 - null']
  %s0 = inlined_call_operand.hbm [shape: f32[8,64], index: 0, kind: input, shape index: {}]
  %s1 = inlined_call_operand.hbm [shape: f32[8,64], index: 1, kind: output, shape index: {}]
  %s2 = sld [smem:[#allocation0]]
  $region2: #{tpu_custom_call.1} parent=0
    _
  %s4 = ssub.s32 1, %s2
  %s5 = scalar_select 0, %s4, %s2
  %s7 = sshll.u32 1, 14
  %s8 = sxor.u32 4294967295, %s7
  %s11 = sshll.u32 3, 24
  %s12 = sxor.u32 4294967295, %s11
  %s13 = sand.u32 0, %s12
  %s15 = sor.u32 %s13, 0
  %18 = dma.general %s0, 128, %s1, [#allocation2], [#allocation3], [#allocation4], %s15, 0
  %s19 = smul.u32 8, 1
  %s20 = sshll.u32 %s19, 4
  %21 = dma.done [#allocation2], %s20
  %22 = vsyncmov [#allocation2]
  %s23 = vpop.sfrf %22
  %p24 = scmp.eq.s32.totalorder %s23, 0
  %p25 = pneg %p24
  %27 = shalt.err (%p25)

</llo_original>
